<compile_context>
chip_gen: v7x
topology: tpu7x:2x2x1
jax: 0.10.0
libtpu: 0.0.40
codegen_flags: <defaults>
</compile_context>

<pallas_src>
import jax
import jax.numpy as jnp
from jax.experimental import pallas as pl
from jax.experimental.pallas import tpu as pltpu

B = 2          # batch size (ref_im.shape[0])
L = 18         # number of style layers (non-tiled latent)
D = 512        # latent / w dimension
NEG_SLOPE = 0.2


def pulse_latent_kernel(latent_ref, std_ref, mean_ref, out_ref):
    """Single-block elementwise affine + LeakyReLU(0.2).

    latent_ref: (rows, D) VMEM tile  (rows = B*L, lane-dense: D = 4*128)
    std_ref   : (1, D)    VMEM tile  (broadcast over rows)
    mean_ref  : (1, D)    VMEM tile  (broadcast over rows)
    out_ref   : (rows, D) VMEM tile
    """
    y = latent_ref[...] * std_ref[...] + mean_ref[...]   # gaussian_fit renorm
    out_ref[...] = jnp.maximum(y, NEG_SLOPE * y)          # LeakyReLU(0.2)


def pulse_latent_transform(latent, std, mean):
    """latent: (B, L, D) f32; std, mean: (D,) f32 -> (B, L, D) f32."""
    b, l, d = latent.shape
    rows = b * l
    x2 = latent.reshape(rows, d)          # flatten to lane-dense 2D
    std2 = std.reshape(1, d)
    mean2 = mean.reshape(1, d)

    out = pl.pallas_call(
        pulse_latent_kernel,
        out_shape=jax.ShapeDtypeStruct((rows, d), latent.dtype),
        grid=(1,),                        # single grid step: whole array is one block
        in_specs=[
            pl.BlockSpec((rows, d), lambda i: (0, 0)),
            pl.BlockSpec((1, d), lambda i: (0, 0)),
            pl.BlockSpec((1, d), lambda i: (0, 0)),
        ],
        out_specs=pl.BlockSpec((rows, d), lambda i: (0, 0)),
    )(x2, std2, mean2)
    return out.reshape(b, l, d)


def reference(latent, std, mean):
    y = latent * std[None, None, :] + mean[None, None, :]
    return jnp.where(y >= 0, y, NEG_SLOPE * y)


if __name__ == "__main__":
    key = jax.random.PRNGKey(0)
    k_lat, k_std, k_mean = jax.random.split(key, 3)

    # latent drawn as in PULSE.forward (torch.randn((B, 18, 512)))
    latent = jax.random.normal(k_lat, (B, L, D), dtype=jnp.float32)

    # deterministic synthetic gaussian_fit (would normally be computed from
    # the StyleGAN2 mapping network); std must be positive.
    gaussian_std = jnp.abs(jax.random.normal(k_std, (D,), dtype=jnp.float32)) + 0.5
    gaussian_mean = 0.1 * jax.random.normal(k_mean, (D,), dtype=jnp.float32)

    out = pulse_latent_transform(latent, gaussian_std, gaussian_mean)
    out = jax.block_until_ready(out)

    ref = reference(latent, gaussian_std, gaussian_mean)
    assert out.shape == (B, L, D)
    assert jnp.allclose(out, ref, atol=1e-6, rtol=1e-6)

    print("KERNEL_OK")
</pallas_src>

<mosaic_0001>
module attributes {stable_mosaic.version = 11 : i64} {
  func.func @pulse_latent_kernel(%arg0: i32, %arg1: memref<36x512xf32, #tpu.memory_space<vmem>>, %arg2: memref<1x512xf32, #tpu.memory_space<vmem>>, %arg3: memref<1x512xf32, #tpu.memory_space<vmem>>, %arg4: memref<36x512xf32, #tpu.memory_space<vmem>>) attributes {dimension_semantics = [#tpu.dimension_semantics<arbitrary>], iteration_bounds = array<i64: 1>, scalar_prefetch = 0 : i64, scratch_operands = 0 : i64, tpu.core_type = #tpu.core_type<tc>, window_params = [{pipeline_mode = #tpu.pipeline_mode<synchronous>, transform_indices = @transform_0, window_bounds = array<i64: 36, 512>}, {pipeline_mode = #tpu.pipeline_mode<synchronous>, transform_indices = @transform_1, window_bounds = array<i64: 1, 512>}, {pipeline_mode = #tpu.pipeline_mode<synchronous>, transform_indices = @transform_2, window_bounds = array<i64: 1, 512>}, {pipeline_mode = #tpu.pipeline_mode<synchronous>, transform_indices = @transform_3, window_bounds = array<i64: 36, 512>}]} {
    %c0 = arith.constant 0 : index
    %c0_0 = arith.constant 0 : index
    %0 = vector.load %arg1[%c0, %c0_0] : memref<36x512xf32, #tpu.memory_space<vmem>>, vector<36x512xf32>
    %c0_1 = arith.constant 0 : index
    %c0_2 = arith.constant 0 : index
    %1 = vector.load %arg2[%c0_1, %c0_2] : memref<1x512xf32, #tpu.memory_space<vmem>>, vector<1x512xf32>
    %2 = vector.broadcast %1 : vector<1x512xf32> to vector<36x512xf32>
    %3 = arith.mulf %0, %2 : vector<36x512xf32>
    %c0_3 = arith.constant 0 : index
    %c0_4 = arith.constant 0 : index
    %4 = vector.load %arg3[%c0_3, %c0_4] : memref<1x512xf32, #tpu.memory_space<vmem>>, vector<1x512xf32>
    %5 = vector.broadcast %4 : vector<1x512xf32> to vector<36x512xf32>
    %6 = arith.addf %3, %5 : vector<36x512xf32>
    %cst = arith.constant 2.000000e-01 : f32
    %7 = vector.broadcast %cst : f32 to vector<36x512xf32>
    %8 = arith.mulf %7, %6 : vector<36x512xf32>
    %9 = arith.maximumf %6, %8 : vector<36x512xf32>
    %c0_5 = arith.constant 0 : index
    %c0_6 = arith.constant 0 : index
    %10 = vector.load %arg4[%c0_5, %c0_6] : memref<36x512xf32, #tpu.memory_space<vmem>>, vector<36x512xf32>
    tpu.vector_store %arg4[%c0_5, %c0_6], %9 {strides = array<i32>} : memref<36x512xf32, #tpu.memory_space<vmem>>, vector<36x512xf32>,
    return
  }
  func.func @transform_0(%arg0: i32) -> (i32, i32) {
    %c0_i32 = arith.constant 0 : i32
    %c0_i32_0 = arith.constant 0 : i32
    %c0_i32_1 = arith.constant 0 : i32
    return %c0_i32, %c0_i32_0 : i32, i32
  }
  func.func @transform_1(%arg0: i32) -> (i32, i32) {
    %c0_i32 = arith.constant 0 : i32
    %c0_i32_0 = arith.constant 0 : i32
    %c0_i32_1 = arith.constant 0 : i32
    return %c0_i32, %c0_i32_0 : i32, i32
  }
  func.func @transform_2(%arg0: i32) -> (i32, i32) {
    %c0_i32 = arith.constant 0 : i32
    %c0_i32_0 = arith.constant 0 : i32
    %c0_i32_1 = arith.constant 0 : i32
    return %c0_i32, %c0_i32_0 : i32, i32
  }
  func.func @transform_3(%arg0: i32) -> (i32, i32) {
    %c0_i32 = arith.constant 0 : i32
    %c0_i32_0 = arith.constant 0 : i32
    %c0_i32_1 = arith.constant 0 : i32
    return %c0_i32, %c0_i32_0 : i32, i32
  }
}

</mosaic_0001>

<llo_original>
// kernel: tpu_custom_call.1
$region0: #{tpu_custom_call.1}
  #allocation0 [shape = 'u32[]', space=smem, size = 0x4, offset = 0x4, fixed_abs, tag = 'smem constant byte address 0x4 - core index']
  #allocation1 [shape = 'u32[144,128]{1,0:T(1,128)}', space=vmem, size = 0x12000, scoped, tag = 'internal scratch']
  %s0 = inlined_call_operand.hbm [shape: f32[36,512], index: 0, kind: input, shape index: {}]
  %s1 = inlined_call_operand.hbm [shape: f32[1,512], index: 1, kind: input, shape index: {}]
  %s2 = inlined_call_operand.vmem [shape: f32[1,512], index: 2, kind: input, shape index: {}]
  %s3 = inlined_call_operand.hbm [shape: f32[36,512], index: 3, kind: output, shape index: {}]
  %s4 = sld [smem:[#allocation0]]
  $region30: #{tpu_custom_call.1} parent=0
    _
  %s6 = ssub.s32 1, %s4
  %s7 = scalar_select 0, %s6, %s4
  $region1: #{tpu_custom_call.1} parent=0
    #allocation2 [shape = 'u8[81920]{0}', space=vmem, size = 0x14000, scoped, tag = 'input window, operand 0, single buffered']
    #allocation3 [shape = 's32[1]{0}', space=sflag, size = 0x4, scoped, tag = 'scoped memory for tpu_custom_call.1']
    #allocation4 [shape = 's32[1]{0}', space=sflag, size = 0x4, scoped, tag = 'scoped memory for tpu_custom_call.1']
    #allocation5 [shape = 'u8[2048]{0}', space=vmem, size = 0x800, scoped, tag = 'input window, operand 1, single buffered']
    #allocation6 [shape = 's32[1]{0}', space=sflag, size = 0x4, scoped, tag = 'scoped memory for tpu_custom_call.1']
    #allocation7 [shape = 'u8[81920]{0}', space=vmem, size = 0x14000, scoped, tag = 'output window, operand 0, single buffered']
    %8 = vsyncpa [#allocation3], 0
    %9 = vsyncpa [#allocation6], 0
    %10 = vsyncpa [#allocation4], 0
    // Predicated region
    $region2: #{tpu_custom_call.1} parent=1 // pred_check
      _
    $region3: #{tpu_custom_call.1} parent=1 // pred_check_branch
      %12 = sbr.rel (0) target = $region5
    $region4: #{tpu_custom_call.1} parent=1 // pred_region
      %s14 = ssub.s32 2560, 2560
      %15 = vsyncadd [#allocation3], %s14
      %s16 = sshll.u32 [#allocation2], 4
      %s17 = int_to_ptr.vmem [resolvable:$true] %s16
      %22 = dma.hbm_to_vmem [thread:$0]  %s0, 2560, %s17, [#allocation3], 512, 512, 32
    $region5: #{tpu_custom_call.1} parent=1 // pred_fallthru
      _
    // Predicated region
    $region6: #{tpu_custom_call.1} parent=1 // pred_check
      _
    $region7: #{tpu_custom_call.1} parent=1 // pred_check_branch
      %24 = sbr.rel (0) target = $region9
    $region8: #{tpu_custom_call.1} parent=1 // pred_region
      %s26 = ssub.s32 64, 64
      %27 = vsyncadd [#allocation6], %s26
      %s29 = sshll.u32 [#allocation5], 4
      %s30 = int_to_ptr.vmem [resolvable:$true] %s29
      %32 = dma.hbm_to_vmem [thread:$0]  %s1, 64, %s30, [#allocation6]
    $region9: #{tpu_custom_call.1} parent=1 // pred_fallthru
      _
    // Predicated region
    $region10: #{tpu_custom_call.1} parent=1 // pred_check
      _
    $region11: #{tpu_custom_call.1} parent=1 // pred_check_branch
      %34 = sbr.rel (0) target = $region13
    $region12: #{tpu_custom_call.1} parent=1 // pred_region
      _
    $region13: #{tpu_custom_call.1} parent=1 // pred_fallthru
      _
    // Predicated region
    $region14: #{tpu_custom_call.1} parent=1 // pred_check
      _
    $region15: #{tpu_custom_call.1} parent=1 // pred_check_branch
      %36 = sbr.rel (0) target = $region17
    $region16: #{tpu_custom_call.1} parent=1 // pred_region
      %37 = dma.done [#allocation3], 2560
    $region17: #{tpu_custom_call.1} parent=1 // pred_fallthru
      _
    // Predicated region
    $region18: #{tpu_custom_call.1} parent=1 // pred_check
      _
    $region19: #{tpu_custom_call.1} parent=1 // pred_check_branch
      %39 = sbr.rel (0) target = $region21
    $region20: #{tpu_custom_call.1} parent=1 // pred_region
      %40 = dma.done [#allocation6], 64
    $region21: #{tpu_custom_call.1} parent=1 // pred_fallthru
      _
    %v41 = vld [vmem:[#allocation2] sm:$0xff]
    %v42 = vld [vmem:[#allocation2 + $0x8] sm:$0xff]
    %v43 = vld [vmem:[#allocation2 + $0x10] sm:$0xff]
    %v44 = vld [vmem:[#allocation2 + $0x18] sm:$0xff]
    %v45 = vld [vmem:[#allocation2 + $0x20] sm:$0xff]
    %v46 = vld [vmem:[#allocation2 + $0x28] sm:$0xff]
    %v47 = vld [vmem:[#allocation2 + $0x30] sm:$0xff]
    %v48 = vld [vmem:[#allocation2 + $0x38] sm:$0xff]
    %v49 = vld [vmem:[#allocation2 + $0x40] sm:$0xff]
    %v50 = vld [vmem:[#allocation2 + $0x48] sm:$0xff]
    %v51 = vld [vmem:[#allocation2 + $0x50] sm:$0xff]
    %v52 = vld [vmem:[#allocation2 + $0x58] sm:$0xff]
    %v53 = vld [vmem:[#allocation2 + $0x60] sm:$0xff]
    %v54 = vld [vmem:[#allocation2 + $0x68] sm:$0xff]
    %v55 = vld [vmem:[#allocation2 + $0x70] sm:$0xff]
    %v56 = vld [vmem:[#allocation2 + $0x78] sm:$0xff]
    %v57 = vld [vmem:[#allocation2 + $0x80] sm:$0xf]
    %v58 = vld [vmem:[#allocation2 + $0x88] sm:$0xf]
    %v59 = vld [vmem:[#allocation2 + $0x90] sm:$0xf]
    %v60 = vld [vmem:[#allocation2 + $0x98] sm:$0xf]
    %v61 = vld [vmem:[#allocation5] sm:$0xf]
    %v63 = vlaneseq
    %v64 = vshrl.u32 %v63, 7
    %v65 = vsub.s32 0, %v64
    %v66 = vrot.slane %v61, %v65
    %v67 = vlaneseq
    %v68 = vshrl.u32 %v67, 7
    %v69 = vsub.s32 1, %v68
    %v70 = vrot.slane %v61, %v69
    %v71 = vlaneseq
    %v72 = vshrl.u32 %v71, 7
    %v73 = vsub.s32 2, %v72
    %v74 = vrot.slane %v61, %v73
    %v75 = vlaneseq
    %v76 = vshrl.u32 %v75, 7
    %v77 = vsub.s32 3, %v76
    %v78 = vrot.slane %v61, %v77
    %v83 = vmul.f32 %v41, %v66
    %v84 = vmul.f32 %v42, %v70
    %v85 = vmul.f32 %v43, %v74
    %v86 = vmul.f32 %v44, %v78
    %v87 = vmul.f32 %v45, %v66
    %v88 = vmul.f32 %v46, %v70
    %v89 = vmul.f32 %v47, %v74
    %v90 = vmul.f32 %v48, %v78
    %v91 = vmul.f32 %v49, %v66
    %v92 = vmul.f32 %v50, %v70
    %v93 = vmul.f32 %v51, %v74
    %v94 = vmul.f32 %v52, %v78
    %v95 = vmul.f32 %v53, %v66
    %v96 = vmul.f32 %v54, %v70
    %v97 = vmul.f32 %v55, %v74
    %v98 = vmul.f32 %v56, %v78
    %v99 = vmul.f32 %v57, %v66
    %v100 = vmul.f32 %v58, %v70
    %v101 = vmul.f32 %v59, %v74
    %v102 = vmul.f32 %v60, %v78
    %v103 = vld [vmem:[%s2] sm:$0xf]
    %v105 = vlaneseq
    %v106 = vshrl.u32 %v105, 7
    %v107 = vsub.s32 0, %v106
    %v108 = vrot.slane %v103, %v107
    %v109 = vlaneseq
    %v110 = vshrl.u32 %v109, 7
    %v111 = vsub.s32 1, %v110
    %v112 = vrot.slane %v103, %v111
    %v113 = vlaneseq
    %v114 = vshrl.u32 %v113, 7
    %v115 = vsub.s32 2, %v114
    %v116 = vrot.slane %v103, %v115
    %v117 = vlaneseq
    %v118 = vshrl.u32 %v117, 7
    %v119 = vsub.s32 3, %v118
    %v120 = vrot.slane %v103, %v119
    %v125 = vadd.f32 %v83, %v108
    %v126 = vadd.f32 %v84, %v112
    %v127 = vadd.f32 %v85, %v116
    %v128 = vadd.f32 %v86, %v120
    %v129 = vadd.f32 %v87, %v108
    %v130 = vadd.f32 %v88, %v112
    %v131 = vadd.f32 %v89, %v116
    %v132 = vadd.f32 %v90, %v120
    %v133 = vadd.f32 %v91, %v108
    %v134 = vadd.f32 %v92, %v112
    %v135 = vadd.f32 %v93, %v116
    %v136 = vadd.f32 %v94, %v120
    %v137 = vadd.f32 %v95, %v108
    %v138 = vadd.f32 %v96, %v112
    %v139 = vadd.f32 %v97, %v116
    %v140 = vadd.f32 %v98, %v120
    %v141 = vadd.f32 %v99, %v108
    %v142 = vadd.f32 %v100, %v112
    %v143 = vadd.f32 %v101, %v116
    %v144 = vadd.f32 %v102, %v120
    %v145 = vmul.f32 %v125, 0.2
    %v146 = vmul.f32 %v126, 0.2
    %v147 = vmul.f32 %v127, 0.2
    %v148 = vmul.f32 %v128, 0.2
    %v149 = vmul.f32 %v129, 0.2
    %v150 = vmul.f32 %v130, 0.2
    %v151 = vmul.f32 %v131, 0.2
    %v152 = vmul.f32 %v132, 0.2
    %v153 = vmul.f32 %v133, 0.2
    %v154 = vmul.f32 %v134, 0.2
    %v155 = vmul.f32 %v135, 0.2
    %v156 = vmul.f32 %v136, 0.2
    %v157 = vmul.f32 %v137, 0.2
    %v158 = vmul.f32 %v138, 0.2
    %v159 = vmul.f32 %v139, 0.2
    %v160 = vmul.f32 %v140, 0.2
    %v161 = vmul.f32 %v141, 0.2
    %v162 = vmul.f32 %v142, 0.2
    %v163 = vmul.f32 %v143, 0.2
    %v164 = vmul.f32 %v144, 0.2
    %v165 = vmax.f32 %v125, %v145
    %v166 = vmax.f32 %v126, %v146
    %v167 = vmax.f32 %v127, %v147
    %v168 = vmax.f32 %v128, %v148
    %v169 = vmax.f32 %v129, %v149
    %v170 = vmax.f32 %v130, %v150
    %v171 = vmax.f32 %v131, %v151
    %v172 = vmax.f32 %v132, %v152
    %v173 = vmax.f32 %v133, %v153
    %v174 = vmax.f32 %v134, %v154
    %v175 = vmax.f32 %v135, %v155
    %v176 = vmax.f32 %v136, %v156
    %v177 = vmax.f32 %v137, %v157
    %v178 = vmax.f32 %v138, %v158
    %v179 = vmax.f32 %v139, %v159
    %v180 = vmax.f32 %v140, %v160
    %v181 = vmax.f32 %v141, %v161
    %v182 = vmax.f32 %v142, %v162
    %v183 = vmax.f32 %v143, %v163
    %v184 = vmax.f32 %v144, %v164
    %185 = vst [vmem:[#allocation7] sm:$0xff] %v165
    %186 = vst [vmem:[#allocation7 + $0x8] sm:$0xff] %v166
    %187 = vst [vmem:[#allocation7 + $0x10] sm:$0xff] %v167
    %188 = vst [vmem:[#allocation7 + $0x18] sm:$0xff] %v168
    %189 = vst [vmem:[#allocation7 + $0x20] sm:$0xff] %v169
    %190 = vst [vmem:[#allocation7 + $0x28] sm:$0xff] %v170
    %191 = vst [vmem:[#allocation7 + $0x30] sm:$0xff] %v171
    %192 = vst [vmem:[#allocation7 + $0x38] sm:$0xff] %v172
    %193 = vst [vmem:[#allocation7 + $0x40] sm:$0xff] %v173
    %194 = vst [vmem:[#allocation7 + $0x48] sm:$0xff] %v174
    %195 = vst [vmem:[#allocation7 + $0x50] sm:$0xff] %v175
    %196 = vst [vmem:[#allocation7 + $0x58] sm:$0xff] %v176
    %197 = vst [vmem:[#allocation7 + $0x60] sm:$0xff] %v177
    %198 = vst [vmem:[#allocation7 + $0x68] sm:$0xff] %v178
    %199 = vst [vmem:[#allocation7 + $0x70] sm:$0xff] %v179
    %200 = vst [vmem:[#allocation7 + $0x78] sm:$0xff] %v180
    %201 = vst [vmem:[#allocation7 + $0x80] sm:$0xf] %v181
    %202 = vst [vmem:[#allocation7 + $0x88] sm:$0xf] %v182
    %203 = vst [vmem:[#allocation7 + $0x90] sm:$0xf] %v183
    %204 = vst [vmem:[#allocation7 + $0x98] sm:$0xf] %v184
    // Predicated region
    $region22: #{tpu_custom_call.1} parent=1 // pred_check
      _
    $region23: #{tpu_custom_call.1} parent=1 // pred_check_branch
      %206 = sbr.rel (0) target = $region25
    $region24: #{tpu_custom_call.1} parent=1 // pred_region
      %s208 = ssub.s32 2560, 2560
      %209 = vsyncadd [#allocation4], %s208
      %s210 = sshll.u32 [#allocation7], 4
      %s211 = int_to_ptr.vmem [resolvable:$true] %s210
      %216 = dma.vmem_to_hbm [thread:$0]  %s211, 2560, %s3, [#allocation4], 512, 512, 32
    $region25: #{tpu_custom_call.1} parent=1 // pred_fallthru
      _
    // Predicated region
    $region26: #{tpu_custom_call.1} parent=1 // pred_check
      _
    $region27: #{tpu_custom_call.1} parent=1 // pred_check_branch
      %218 = sbr.rel (0) target = $region29
    $region28: #{tpu_custom_call.1} parent=1 // pred_region
      %219 = dma.done [#allocation4], 2560
    $region29: #{tpu_custom_call.1} parent=1 // pred_fallthru
      _
    %220 = vsyncpa [#allocation3], 1
    %221 = vsyncpa [#allocation6], 1
    %222 = vsyncpa [#allocation4], 1

</llo_original>
